<compile_context>
chip_gen: v7x
topology: tpu7x:2x2x1
jax: 0.10.0
libtpu: 0.0.40
codegen_flags: <defaults>
</compile_context>

<pallas_src>
import functools

import jax
import jax.numpy as jnp
from jax import lax
from jax.experimental import pallas as pl
from jax.experimental.pallas import tpu as pltpu

_LANE = 128
_LANE_PAD = 512            # flattened lane axis is padded to a multiple of this
_MAX_LANE_TILE = 4096
_MiB = 1024 * 1024


# ----------------------------------------------------------------------------
# VMEM budget & tile pickers
# ----------------------------------------------------------------------------
def _vmem_budget_bytes():
    """Per-call VMEM budget derived from the actual chip (v7x has only 64 MiB/TC)."""
    try:
        phys = pltpu.get_tpu_info().vmem_capacity_bytes
    except Exception:
        phys = 64 * _MiB       # assume the smallest generation if the query fails
    return int(min(max(phys - 24 * _MiB, 16 * _MiB), 64 * _MiB))


def _pick_lane_tile(total, bytes_per_lane, budget, cap=_MAX_LANE_TILE):
    """Largest multiple of 128 dividing `total`, <= cap, whose footprint fits budget."""
    tl = (min(total, cap) // _LANE) * _LANE
    while tl > _LANE and (total % tl != 0 or tl * bytes_per_lane > budget):
        tl -= _LANE
    return max(tl, _LANE)


def _pick_row_tile(rows, row_bytes, budget):
    t = max(1, min(rows, budget // max(row_bytes, 1)))
    while rows % t:
        t -= 1
    return t


# ----------------------------------------------------------------------------
# Kernel 1: fused-contraction conv + resident per-channel batch statistics
# ----------------------------------------------------------------------------
def _conv_stats_kernel(*refs, k, c_in):
    """refs = (w_ref, x_ref_0..k-1, y_ref, stats_ref[, stage_ref])

    w_ref:     (C_out, k*C_in) bf16, resident (constant block index)
    x_ref[kh]: (C_in, TL)      input row (ho*s + kh) for this step's lane tile
    y_ref:     (C_out, TL) f32 conv output (no bias -- absorbed by train-mode BN)
    stats_ref: (C_out, 2)  f32 [sum, sum-of-squares], resident across the inner axis
    stage_ref: (k*C_in, TL) f32 VMEM scratch stacking the k taps along sublanes
    """
    w_ref = refs[0]
    x_refs = refs[1:1 + k]
    y_ref = refs[1 + k]
    stats_ref = refs[2 + k]

    @pl.when(pl.program_id(1) == 0)
    def _init():
        stats_ref[...] = jnp.zeros_like(stats_ref)

    if k > 1:
        stage_ref = refs[3 + k]
        for kh in range(k):     # static unroll: stack taps along sublanes in VMEM
            stage_ref[kh * c_in:(kh + 1) * c_in, :] = (
                x_refs[kh][...].astype(jnp.float32))
        xs = stage_ref[...].astype(jnp.bfloat16)
    else:
        xs = x_refs[0][...].astype(jnp.bfloat16)

    # Single MXU matmul with contraction depth k*C_in (f32 accumulation).
    acc = jnp.dot(w_ref[...], xs, preferred_element_type=jnp.float32)
    y_ref[...] = acc

    # Running per-channel batch statistics (zero-padded lanes contribute exactly 0).
    stats_ref[:, 0:1] += jnp.sum(acc, axis=-1, keepdims=True)
    stats_ref[:, 1:2] += jnp.sum(acc * acc, axis=-1, keepdims=True)


# ----------------------------------------------------------------------------
# Kernel 2: folded BatchNorm affine (a*y + c) + ReLU, written in place
# ----------------------------------------------------------------------------
def _bn_relu_kernel(y_ref, a_ref, c_ref, o_ref):
    c_out = a_ref.shape[0]
    bshape = (1,) * (len(y_ref.shape) - 2) + (c_out, 1)
    a = a_ref[...].reshape(bshape)
    c = c_ref[...].reshape(bshape)
    o_ref[...] = jnp.maximum(y_ref[...] * a + c, 0.0)


# ----------------------------------------------------------------------------
# Wrapper
# ----------------------------------------------------------------------------
@functools.partial(jax.jit, static_argnames=("kernel_size", "stride"))
def temporal_block_forward(x, conv_w, conv_b, gamma, beta, kernel_size, stride,
                           eps=1e-5):
    """x: (N, C_in, H, W) f32 -> (N, C_out, H_out, W) f32 (Conv -> train-BN -> ReLU)."""
    # Bias before train-mode BatchNorm is cancelled exactly by the batch-mean
    # subtraction, so the forward output does not depend on it.
    del conv_b
    N, C_in, H, W = x.shape
    C_out = conv_w.shape[0]
    k, s = int(kernel_size), int(stride)
    H_out = (H - k) // s + 1
    count = float(N * H_out * W)

    budget = _vmem_budget_bytes()

    def cparams(sem):
        return pltpu.CompilerParams(dimension_semantics=sem,
                                    vmem_limit_bytes=budget)

    # Fused-contraction weights: (C_out, C_in, k, 1) -> (C_out, k*C_in), tap-major.
    w2 = jnp.transpose(conv_w[:, :, :, 0], (0, 2, 1)).reshape(C_out, k * C_in)
    w2 = w2.astype(jnp.bfloat16)
    w_spec = pl.BlockSpec((C_out, k * C_in), lambda i, j: (0, 0))
    conv_kernel = functools.partial(_conv_stats_kernel, k=k, c_in=C_in)
    stage_scratch = lambda tl: (
        [pltpu.VMEM((k * C_in, tl), jnp.float32)] if k > 1 else [])

    # ---- Pass 1: conv + per-channel partial batch statistics -----------------------
    direct_lane_bytes = 2 * k * C_in * 4 + 2 * C_out * 4 + k * C_in * 4
    direct = (W % _LANE == 0) and (W * direct_lane_bytes <= (budget * 3) // 4)

    if direct:
        # No-relayout path: read NCHW via a free (N, C_in, H*W) view; pass 2 later
        # writes the final NCHW layout in place. No XLA glue transposes at all.
        x3 = x.reshape(N, C_in, H * W)

        def _x_spec(kh):
            return pl.BlockSpec((None, C_in, W),
                                lambda n, ho: (n, 0, ho * s + kh))

        y_buf, stats = pl.pallas_call(
            conv_kernel,
            out_shape=(jax.ShapeDtypeStruct((N, C_out, H_out * W), jnp.float32),
                       jax.ShapeDtypeStruct((N, C_out, 2), jnp.float32)),
            grid_spec=pltpu.PrefetchScalarGridSpec(
                num_scalar_prefetch=0,
                grid=(N, H_out),
                in_specs=[w_spec, *[_x_spec(kh) for kh in range(k)]],
                out_specs=[pl.BlockSpec((None, C_out, W), lambda n, ho: (n, 0, ho)),
                           pl.BlockSpec((None, C_out, 2), lambda n, ho: (n, 0, 0))],
                scratch_shapes=stage_scratch(W)),
            compiler_params=cparams(("parallel", "arbitrary")),
        )(w2, *([x3] * k))
    else:
        # Flattened path (small / unaligned W): lane axis = N*W, zero-padded to a
        # multiple of 512 so the lane tile never degrades to 128; bf16 operands cut
        # the relayout write and pass-1 input DMA traffic in half.
        H_used = (H_out - 1) * s + k
        NW = N * W
        L = pl.cdiv(NW, _LANE_PAD) * _LANE_PAD
        xt = jnp.transpose(x[:, :, :H_used, :], (2, 1, 0, 3)).reshape(H_used, C_in, NW)
        xt = jnp.pad(xt.astype(jnp.bfloat16), ((0, 0), (0, 0), (0, L - NW)))

        lane_bytes = 2 * k * C_in * 2 + 2 * C_out * 4 + k * C_in * 4
        TL = _pick_lane_tile(L, lane_bytes, (budget * 3) // 4)

        def _x_spec(kh):
            return pl.BlockSpec((None, C_in, TL),
                                lambda i, j: (i * s + kh, 0, j))

        y_buf, stats = pl.pallas_call(
            conv_kernel,
            out_shape=(jax.ShapeDtypeStruct((H_out, C_out, L), jnp.float32),
                       jax.ShapeDtypeStruct((H_out, C_out, 2), jnp.float32)),
            grid_spec=pltpu.PrefetchScalarGridSpec(
                num_scalar_prefetch=0,
                grid=(H_out, L // TL),
                in_specs=[w_spec, *[_x_spec(kh) for kh in range(k)]],
                out_specs=[pl.BlockSpec((None, C_out, TL), lambda i, j: (i, 0, j)),
                           pl.BlockSpec((None, C_out, 2), lambda i, j: (i, 0, 0))],
                scratch_shapes=stage_scratch(TL)),
            compiler_params=cparams(("parallel", "arbitrary")),
        )(w2, *([xt] * k))

    # ---- Glue: batch mean / biased variance -> folded BN affine (tiny tensors) -----
    ch_sum = jnp.sum(stats[..., 0], axis=0)
    ch_sq = jnp.sum(stats[..., 1], axis=0)
    mean = ch_sum / count
    var = jnp.maximum(ch_sq / count - mean * mean, 0.0)   # biased (train-mode) variance
    a = gamma.astype(jnp.float32) * lax.rsqrt(var + eps)
    c = beta.astype(jnp.float32) - mean * a
    a_col = a.reshape(C_out, 1)
    c_col = c.reshape(C_out, 1)
    ac_spec = pl.BlockSpec((C_out, 1), lambda i, j: (0, 0))

    # ---- Pass 2: folded BN affine + ReLU, in place on the conv buffer --------------
    lane_bytes2 = 2 * 2 * C_out * 4               # in + aliased out, double-buffered
    if direct:
        HWo = H_out * W
        TL2 = _pick_lane_tile(HWo, lane_bytes2, (budget * 3) // 4)
        y_bn = pl.pallas_call(
            _bn_relu_kernel,
            out_shape=jax.ShapeDtypeStruct((N, C_out, HWo), jnp.float32),
            grid_spec=pltpu.PrefetchScalarGridSpec(
                num_scalar_prefetch=0,
                grid=(N, HWo // TL2),
                in_specs=[pl.BlockSpec((None, C_out, TL2), lambda n, j: (n, 0, j)),
                          ac_spec, ac_spec],
                out_specs=pl.BlockSpec((None, C_out, TL2), lambda n, j: (n, 0, j))),
            input_output_aliases={0: 0},
            compiler_params=cparams(("parallel", "parallel")),
        )(y_buf, a_col, c_col)
        return y_bn.reshape(N, C_out, H_out, W)     # free reshape, already NCHW order

    L = y_buf.shape[-1]
    TL2 = _pick_lane_tile(L, lane_bytes2, budget // 2)
    TH2 = _pick_row_tile(H_out, lane_bytes2 * TL2, budget // 2)
    y_bn = pl.pallas_call(
        _bn_relu_kernel,
        out_shape=jax.ShapeDtypeStruct((H_out, C_out, L), jnp.float32),
        grid_spec=pltpu.PrefetchScalarGridSpec(
            num_scalar_prefetch=0,
            grid=(H_out // TH2, L // TL2),
            in_specs=[pl.BlockSpec((TH2, C_out, TL2), lambda i, j: (i, 0, j)),
                      ac_spec, ac_spec],
            out_specs=pl.BlockSpec((TH2, C_out, TL2), lambda i, j: (i, 0, j))),
        input_output_aliases={0: 0},
        compiler_params=cparams(("parallel", "parallel")),
    )(y_buf, a_col, c_col)
    out = y_bn[:, :, :N * W].reshape(H_out, C_out, N, W)
    return jnp.transpose(out, (2, 1, 0, 3))


# ----------------------------------------------------------------------------
# Pure-JAX reference (correctness check)
# ----------------------------------------------------------------------------
def temporal_block_ref(x, conv_w, conv_b, gamma, beta, kernel_size, stride, eps=1e-5):
    y = lax.conv_general_dilated(
        x, conv_w, window_strides=(stride, 1), padding="VALID",
        dimension_numbers=("NCHW", "OIHW", "NCHW"))
    y = y + conv_b.reshape(1, -1, 1, 1)
    mean = jnp.mean(y, axis=(0, 2, 3), keepdims=True)
    var = jnp.mean((y - mean) ** 2, axis=(0, 2, 3), keepdims=True)  # biased (train mode)
    yn = (y - mean) / jnp.sqrt(var + eps)
    yn = yn * gamma.reshape(1, -1, 1, 1) + beta.reshape(1, -1, 1, 1)
    return jnp.maximum(yn, 0.0)


if __name__ == "__main__":
    key = jax.random.PRNGKey(0)
    kx, kw, kb, kx2 = jax.random.split(key, 4)

    N, C_in, H, W = 2, 4, 16, 16
    C_out, kernel_size, stride = 8, 3, 2

    x = jax.random.normal(kx, (N, C_in, H, W), dtype=jnp.float32)
    conv_w = 0.1 * jax.random.normal(kw, (C_out, C_in, kernel_size, 1), dtype=jnp.float32)
    conv_b = 0.05 * jax.random.normal(kb, (C_out,), dtype=jnp.float32)
    gamma = jnp.ones((C_out,), dtype=jnp.float32)    # PyTorch BatchNorm2d default init
    beta = jnp.zeros((C_out,), dtype=jnp.float32)

    # --- Small-W case: exercises the flattened / lane-padded path.
    out = jax.block_until_ready(temporal_block_forward(
        x, conv_w, conv_b, gamma, beta, kernel_size=kernel_size, stride=stride))
    ref = temporal_block_ref(x, conv_w, conv_b, gamma, beta, kernel_size, stride)
    assert out.shape == ref.shape == (N, C_out, (H - kernel_size) // stride + 1, W)
    # bf16 MXU operands (f32 accumulation) -> looser tolerance than a pure-f32 path.
    err = float(jnp.max(jnp.abs(out - ref)))
    assert err < 3e-2, err

    # --- Lane-aligned-W case: exercises the direct NCHW path (no relayout transposes).
    W2 = 128
    x2 = jax.random.normal(kx2, (N, C_in, H, W2), dtype=jnp.float32)
    out2 = jax.block_until_ready(temporal_block_forward(
        x2, conv_w, conv_b, gamma, beta, kernel_size=kernel_size, stride=stride))
    ref2 = temporal_block_ref(x2, conv_w, conv_b, gamma, beta, kernel_size, stride)
    assert out2.shape == ref2.shape == (N, C_out, (H - kernel_size) // stride + 1, W2)
    err2 = float(jnp.max(jnp.abs(out2 - ref2)))
    assert err2 < 3e-2, err2

    print("KERNEL_OK")
</pallas_src>

<mosaic_0001>
module attributes {stable_mosaic.version = 11 : i64} {
  func.func @_conv_stats_kernel(%arg0: i32, %arg1: i32, %arg2: memref<8x12xbf16, #tpu.memory_space<vmem>>, %arg3: memref<1x4x512xbf16, #tpu.memory_space<vmem>>, %arg4: memref<1x4x512xbf16, #tpu.memory_space<vmem>>, %arg5: memref<1x4x512xbf16, #tpu.memory_space<vmem>>, %arg6: memref<1x8x512xf32, #tpu.memory_space<vmem>>, %arg7: memref<1x8x2xf32, #tpu.memory_space<vmem>>, %arg8: memref<12x512xf32, #tpu.memory_space<vmem>>) attributes {dimension_semantics = [#tpu.dimension_semantics<parallel>, #tpu.dimension_semantics<arbitrary>], iteration_bounds = array<i64: 7, 1>, scalar_prefetch = 0 : i64, scratch_operands = 1 : i64, tpu.core_type = #tpu.core_type<tc>, window_params = [{pipeline_mode = #tpu.pipeline_mode<synchronous>, transform_indices = @transform_0, window_bounds = array<i64: 8, 12>}, {transform_indices = @transform_1, window_bounds = array<i64: 1, 4, 512>}, {transform_indices = @transform_2, window_bounds = array<i64: 1, 4, 512>}, {transform_indices = @transform_3, window_bounds = array<i64: 1, 4, 512>}, {transform_indices = @transform_4, window_bounds = array<i64: 1, 8, 512>}, {transform_indices = @transform_5, window_bounds = array<i64: 1, 8, 2>}]} {
    %c0_i32 = arith.constant 0 : i32
    %0 = arith.cmpi eq, %arg1, %c0_i32 : i32
    %1 = arith.extui %0 : i1 to i32
    %c0_i32_0 = arith.constant 0 : i32
    %2 = arith.cmpi ne, %1, %c0_i32_0 : i32
    scf.if %2 {
      %cst_33 = arith.constant 0.000000e+00 : f32
      %39 = vector.broadcast %cst_33 : f32 to vector<8x2xf32>
      %c0_34 = arith.constant 0 : index
      %c0_35 = arith.constant 0 : index
      %c0_36 = arith.constant 0 : index
      %40 = vector.load %arg7[%c0_34, %c0_35, %c0_36] : memref<1x8x2xf32, #tpu.memory_space<vmem>>, vector<1x8x2xf32>
      %41 = vector.shape_cast %40 : vector<1x8x2xf32> to vector<8x2xf32>
      %42 = vector.shape_cast %39 : vector<8x2xf32> to vector<1x8x2xf32>
      tpu.vector_store %arg7[%c0_34, %c0_35, %c0_36], %42 {strides = array<i32>} : memref<1x8x2xf32, #tpu.memory_space<vmem>>, vector<1x8x2xf32>,
    } else {
    }
    %c0 = arith.constant 0 : index
    %c0_1 = arith.constant 0 : index
    %c0_2 = arith.constant 0 : index
    %3 = vector.load %arg3[%c0, %c0_1, %c0_2] : memref<1x4x512xbf16, #tpu.memory_space<vmem>>, vector<1x4x512xbf16>
    %4 = vector.shape_cast %3 : vector<1x4x512xbf16> to vector<4x512xbf16>
    %5 = arith.extf %4 : vector<4x512xbf16> to vector<4x512xf32>
    %c0_3 = arith.constant 0 : index
    %c0_4 = arith.constant 0 : index
    %6 = vector.load %arg8[%c0_3, %c0_4] : memref<12x512xf32, #tpu.memory_space<vmem>>, vector<4x512xf32>
    tpu.vector_store %arg8[%c0_3, %c0_4], %5 {strides = array<i32>} : memref<12x512xf32, #tpu.memory_space<vmem>>, vector<4x512xf32>,
    %c0_5 = arith.constant 0 : index
    %c0_6 = arith.constant 0 : index
    %c0_7 = arith.constant 0 : index
    %7 = vector.load %arg4[%c0_5, %c0_6, %c0_7] : memref<1x4x512xbf16, #tpu.memory_space<vmem>>, vector<1x4x512xbf16>
    %8 = vector.shape_cast %7 : vector<1x4x512xbf16> to vector<4x512xbf16>
    %9 = arith.extf %8 : vector<4x512xbf16> to vector<4x512xf32>
    %c4 = arith.constant 4 : index
    %c0_8 = arith.constant 0 : index
    %10 = vector.load %arg8[%c4, %c0_8] : memref<12x512xf32, #tpu.memory_space<vmem>>, vector<4x512xf32>
    tpu.vector_store %arg8[%c4, %c0_8], %9 {strides = array<i32>} : memref<12x512xf32, #tpu.memory_space<vmem>>, vector<4x512xf32>,
    %c0_9 = arith.constant 0 : index
    %c0_10 = arith.constant 0 : index
    %c0_11 = arith.constant 0 : index
    %11 = vector.load %arg5[%c0_9, %c0_10, %c0_11] : memref<1x4x512xbf16, #tpu.memory_space<vmem>>, vector<1x4x512xbf16>
    %12 = vector.shape_cast %11 : vector<1x4x512xbf16> to vector<4x512xbf16>
    %13 = arith.extf %12 : vector<4x512xbf16> to vector<4x512xf32>
    %c8 = arith.constant 8 : index
    %c0_12 = arith.constant 0 : index
    %14 = vector.load %arg8[%c8, %c0_12] : memref<12x512xf32, #tpu.memory_space<vmem>>, vector<4x512xf32>
    tpu.vector_store %arg8[%c8, %c0_12], %13 {strides = array<i32>} : memref<12x512xf32, #tpu.memory_space<vmem>>, vector<4x512xf32>,
    %c0_13 = arith.constant 0 : index
    %c0_14 = arith.constant 0 : index
    %15 = vector.load %arg8[%c0_13, %c0_14] : memref<12x512xf32, #tpu.memory_space<vmem>>, vector<12x512xf32>
    %16 = arith.truncf %15 : vector<12x512xf32> to vector<12x512xbf16>
    %c0_15 = arith.constant 0 : index
    %c0_16 = arith.constant 0 : index
    %17 = vector.load %arg2[%c0_15, %c0_16] : memref<8x12xbf16, #tpu.memory_space<vmem>>, vector<8x12xbf16>
    %cst = arith.constant dense<0.000000e+00> : vector<8x512xf32>
    %18 = tpu.matmul %17, %16, %cst {dimension_numbers = #tpu.dot_dimension_numbers<[1], [0], [0], [1], [0, 0, 1, 1], [], []>} : vector<8x12xbf16>, vector<12x512xbf16>, vector<8x512xf32> -> vector<8x512xf32>
    %c0_17 = arith.constant 0 : index
    %c0_18 = arith.constant 0 : index
    %c0_19 = arith.constant 0 : index
    %19 = vector.load %arg6[%c0_17, %c0_18, %c0_19] : memref<1x8x512xf32, #tpu.memory_space<vmem>>, vector<1x8x512xf32>
    %20 = vector.shape_cast %19 : vector<1x8x512xf32> to vector<8x512xf32>
    %21 = vector.shape_cast %18 : vector<8x512xf32> to vector<1x8x512xf32>
    tpu.vector_store %arg6[%c0_17, %c0_18, %c0_19], %21 {strides = array<i32>} : memref<1x8x512xf32, #tpu.memory_space<vmem>>, vector<1x8x512xf32>,
    %c0_20 = arith.constant 0 : index
    %c0_21 = arith.constant 0 : index
    %c0_22 = arith.constant 0 : index
    %22 = vector.load %arg7[%c0_20, %c0_21, %c0_22] : memref<1x8x2xf32, #tpu.memory_space<vmem>>, vector<1x8x1xf32>
    %23 = vector.shape_cast %22 : vector<1x8x1xf32> to vector<8x1xf32>
    %cst_23 = arith.constant dense<0.000000e+00> : vector<8xf32>
    %24 = vector.multi_reduction <add>, %18, %cst_23 [1] : vector<8x512xf32> to vector<8xf32>
    %25 = vector.shape_cast %24 : vector<8xf32> to vector<8x1xf32>
    %26 = arith.addf %23, %25 : vector<8x1xf32>
    %c0_24 = arith.constant 0 : index
    %c0_25 = arith.constant 0 : index
    %c0_26 = arith.constant 0 : index
    %27 = vector.load %arg7[%c0_24, %c0_25, %c0_26] : memref<1x8x2xf32, #tpu.memory_space<vmem>>, vector<1x8x1xf32>
    %28 = vector.shape_cast %27 : vector<1x8x1xf32> to vector<8x1xf32>
    %29 = vector.shape_cast %26 : vector<8x1xf32> to vector<1x8x1xf32>
    tpu.vector_store %arg7[%c0_24, %c0_25, %c0_26], %29 {strides = array<i32>} : memref<1x8x2xf32, #tpu.memory_space<vmem>>, vector<1x8x1xf32>,
    %c0_27 = arith.constant 0 : index
    %c0_28 = arith.constant 0 : index
    %c1 = arith.constant 1 : index
    %30 = vector.load %arg7[%c0_27, %c0_28, %c1] : memref<1x8x2xf32, #tpu.memory_space<vmem>>, vector<1x8x1xf32>
    %31 = vector.shape_cast %30 : vector<1x8x1xf32> to vector<8x1xf32>
    %32 = arith.mulf %18, %18 : vector<8x512xf32>
    %cst_29 = arith.constant dense<0.000000e+00> : vector<8xf32>
    %33 = vector.multi_reduction <add>, %32, %cst_29 [1] : vector<8x512xf32> to vector<8xf32>
    %34 = vector.shape_cast %33 : vector<8xf32> to vector<8x1xf32>
    %35 = arith.addf %31, %34 : vector<8x1xf32>
    %c0_30 = arith.constant 0 : index
    %c0_31 = arith.constant 0 : index
    %c1_32 = arith.constant 1 : index
    %36 = vector.load %arg7[%c0_30, %c0_31, %c1_32] : memref<1x8x2xf32, #tpu.memory_space<vmem>>, vector<1x8x1xf32>
    %37 = vector.shape_cast %36 : vector<1x8x1xf32> to vector<8x1xf32>
    %38 = vector.shape_cast %35 : vector<8x1xf32> to vector<1x8x1xf32>
    tpu.vector_store %arg7[%c0_30, %c0_31, %c1_32], %38 {strides = array<i32>} : memref<1x8x2xf32, #tpu.memory_space<vmem>>, vector<1x8x1xf32>,
    return
  }
  func.func @transform_0(%arg0: i32, %arg1: i32) -> (i32, i32) {
    %c0_i32 = arith.constant 0 : i32
    %c0_i32_0 = arith.constant 0 : i32
    %c0_i32_1 = arith.constant 0 : i32
    return %c0_i32, %c0_i32_0 : i32, i32
  }
  func.func @transform_1(%arg0: i32, %arg1: i32) -> (i32, i32, i32) {
    %c2_i32 = arith.constant 2 : i32
    %0 = arith.muli %arg0, %c2_i32 : i32
    %c0_i32 = arith.constant 0 : i32
    %1 = arith.addi %0, %c0_i32 : i32
    %c0_i32_0 = arith.constant 0 : i32
    %c0_i32_1 = arith.constant 0 : i32
    return %1, %c0_i32_0, %arg1 : i32, i32, i32
  }
  func.func @transform_2(%arg0: i32, %arg1: i32) -> (i32, i32, i32) {
    %c2_i32 = arith.constant 2 : i32
    %0 = arith.muli %arg0, %c2_i32 : i32
    %c1_i32 = arith.constant 1 : i32
    %1 = arith.addi %0, %c1_i32 : i32
    %c0_i32 = arith.constant 0 : i32
    %c0_i32_0 = arith.constant 0 : i32
    return %1, %c0_i32, %arg1 : i32, i32, i32
  }
  func.func @transform_3(%arg0: i32, %arg1: i32) -> (i32, i32, i32) {
    %c2_i32 = arith.constant 2 : i32
    %0 = arith.muli %arg0, %c2_i32 : i32
    %c2_i32_0 = arith.constant 2 : i32
    %1 = arith.addi %0, %c2_i32_0 : i32
    %c0_i32 = arith.constant 0 : i32
    %c0_i32_1 = arith.constant 0 : i32
    return %1, %c0_i32, %arg1 : i32, i32, i32
  }
  func.func @transform_4(%arg0: i32, %arg1: i32) -> (i32, i32, i32) {
    %c0_i32 = arith.constant 0 : i32
    %c0_i32_0 = arith.constant 0 : i32
    return %arg0, %c0_i32, %arg1 : i32, i32, i32
  }
  func.func @transform_5(%arg0: i32, %arg1: i32) -> (i32, i32, i32) {
    %c0_i32 = arith.constant 0 : i32
    %c0_i32_0 = arith.constant 0 : i32
    %c0_i32_1 = arith.constant 0 : i32
    return %arg0, %c0_i32, %c0_i32_0 : i32, i32, i32
  }
}

module attributes {stable_mosaic.version = 11 : i64} {
  func.func @_bn_relu_kernel(%arg0: i32, %arg1: i32, %arg2: memref<7x8x512xf32, #tpu.memory_space<vmem>>, %arg3: memref<8x1xf32, #tpu.memory_space<vmem>>, %arg4: memref<8x1xf32, #tpu.memory_space<vmem>>, %arg5: memref<7x8x512xf32, #tpu.memory_space<vmem>>) attributes {dimension_semantics = [#tpu.dimension_semantics<parallel>, #tpu.dimension_semantics<parallel>], iteration_bounds = array<i64: 1, 1>, scalar_prefetch = 0 : i64, scratch_operands = 0 : i64, tpu.core_type = #tpu.core_type<tc>, window_params = [{transform_indices = @transform_0, window_bounds = array<i64: 7, 8, 512>}, {pipeline_mode = #tpu.pipeline_mode<synchronous>, transform_indices = @transform_1, window_bounds = array<i64: 8, 1>}, {pipeline_mode = #tpu.pipeline_mode<synchronous>, transform_indices = @transform_2, window_bounds = array<i64: 8, 1>}, {transform_indices = @transform_3, window_bounds = array<i64: 7, 8, 512>}]} {
    %c0 = arith.constant 0 : index
    %c0_0 = arith.constant 0 : index
    %0 = vector.load %arg3[%c0, %c0_0] : memref<8x1xf32, #tpu.memory_space<vmem>>, vector<8x1xf32>
    %1 = vector.shape_cast %0 : vector<8x1xf32> to vector<1x8x1xf32>
    %c0_1 = arith.constant 0 : index
    %c0_2 = arith.constant 0 : index
    %2 = vector.load %arg4[%c0_1, %c0_2] : memref<8x1xf32, #tpu.memory_space<vmem>>, vector<8x1xf32>
    %3 = vector.shape_cast %2 : vector<8x1xf32> to vector<1x8x1xf32>
    %c0_3 = arith.constant 0 : index
    %c0_4 = arith.constant 0 : index
    %c0_5 = arith.constant 0 : index
    %4 = vector.load %arg2[%c0_3, %c0_4, %c0_5] : memref<7x8x512xf32, #tpu.memory_space<vmem>>, vector<7x8x512xf32>
    %5 = vector.broadcast %1 : vector<1x8x1xf32> to vector<7x8x512xf32>
    %6 = arith.mulf %4, %5 : vector<7x8x512xf32>
    %7 = vector.broadcast %3 : vector<1x8x1xf32> to vector<7x8x512xf32>
    %8 = arith.addf %6, %7 : vector<7x8x512xf32>
    %cst = arith.constant 0.000000e+00 : f32
    %9 = vector.broadcast %cst : f32 to vector<7x8x512xf32>
    %10 = arith.maximumf %8, %9 : vector<7x8x512xf32>
    %c0_6 = arith.constant 0 : index
    %c0_7 = arith.constant 0 : index
    %c0_8 = arith.constant 0 : index
    %11 = vector.load %arg5[%c0_6, %c0_7, %c0_8] : memref<7x8x512xf32, #tpu.memory_space<vmem>>, vector<7x8x512xf32>
    tpu.vector_store %arg5[%c0_6, %c0_7, %c0_8], %10 {strides = array<i32>} : memref<7x8x512xf32, #tpu.memory_space<vmem>>, vector<7x8x512xf32>,
    return
  }
  func.func @transform_0(%arg0: i32, %arg1: i32) -> (i32, i32, i32) {
    %c0_i32 = arith.constant 0 : i32
    %c0_i32_0 = arith.constant 0 : i32
    return %arg0, %c0_i32, %arg1 : i32, i32, i32
  }
  func.func @transform_1(%arg0: i32, %arg1: i32) -> (i32, i32) {
    %c0_i32 = arith.constant 0 : i32
    %c0_i32_0 = arith.constant 0 : i32
    %c0_i32_1 = arith.constant 0 : i32
    return %c0_i32, %c0_i32_0 : i32, i32
  }
  func.func @transform_2(%arg0: i32, %arg1: i32) -> (i32, i32) {
    %c0_i32 = arith.constant 0 : i32
    %c0_i32_0 = arith.constant 0 : i32
    %c0_i32_1 = arith.constant 0 : i32
    return %c0_i32, %c0_i32_0 : i32, i32
  }
  func.func @transform_3(%arg0: i32, %arg1: i32) -> (i32, i32, i32) {
    %c0_i32 = arith.constant 0 : i32
    %c0_i32_0 = arith.constant 0 : i32
    return %arg0, %c0_i32, %arg1 : i32, i32, i32
  }
}

</mosaic_0001>

<llo_original>
// kernel: temporal_block_forward.3
$region0: #{temporal_block_forward.3}
  #allocation0 [shape = 'u32[]', space=smem, size = 0x4, offset = 0x4, fixed_abs, tag = 'smem constant byte address 0x4 - core index']
  #allocation1 [shape = 'u32[144,128]{1,0:T(1,128)}', space=vmem, size = 0x12000, scoped, tag = 'internal scratch']
  %s0 = inlined_call_operand.vmem [shape: f32[7,8,512], index: 0, kind: input, shape index: {}, may-alias: {0,3}]
  %s1 = inlined_call_operand.vmem [shape: f32[8,1], index: 1, kind: input, shape index: {}]
  %s2 = inlined_call_operand.vmem [shape: f32[8,1], index: 2, kind: input, shape index: {}]
  %s3 = inlined_call_operand.vmem [shape: f32[7,8,512], index: 3, kind: output, shape index: {}, may-alias: {0,3}]
  %s4 = sld [smem:[#allocation0]]
  $region22: #{temporal_block_forward.3} parent=0
    _
  %s6 = ssub.s32 1, %s4
  %s7 = scalar_select 0, %s6, %s4
  // Predicated region
  $region2: #{temporal_block_forward.3} parent=0 // pred_check
    _
  $region3: #{temporal_block_forward.3} parent=0 // pred_check_branch
    %9 = sbr.rel (0) target = $region5
  $region4: #{temporal_block_forward.3} parent=0 // pred_region
    _
  $region5: #{temporal_block_forward.3} parent=0 // pred_fallthru
    _
  // Predicated region
  $region6: #{temporal_block_forward.3} parent=0 // pred_check
    _
  $region7: #{temporal_block_forward.3} parent=0 // pred_check_branch
    %11 = sbr.rel (0) target = $region9
  $region8: #{temporal_block_forward.3} parent=0 // pred_region
    _
  $region9: #{temporal_block_forward.3} parent=0 // pred_fallthru
    _
  // Predicated region
  $region10: #{temporal_block_forward.3} parent=0 // pred_check
    _
  $region11: #{temporal_block_forward.3} parent=0 // pred_check_branch
    %13 = sbr.rel (0) target = $region13
  $region12: #{temporal_block_forward.3} parent=0 // pred_region
    _
  $region13: #{temporal_block_forward.3} parent=0 // pred_fallthru
    _
  %v14 = vld [vmem:[%s1] sm:$0xff]
  %v15 = vld [vmem:[%s2] sm:$0xff]
  %v16 = vld [vmem:[%s0] sm:$0xff]
  %v17 = vld [vmem:[%s0 + $0x8] sm:$0xff]
  %v18 = vld [vmem:[%s0 + $0x10] sm:$0xff]
  %v19 = vld [vmem:[%s0 + $0x18] sm:$0xff]
  %v20 = vld [vmem:[%s0 + $0x20] sm:$0xff]
  %v21 = vld [vmem:[%s0 + $0x28] sm:$0xff]
  %v22 = vld [vmem:[%s0 + $0x30] sm:$0xff]
  %v23 = vld [vmem:[%s0 + $0x38] sm:$0xff]
  %v24 = vld [vmem:[%s0 + $0x40] sm:$0xff]
  %v25 = vld [vmem:[%s0 + $0x48] sm:$0xff]
  %v26 = vld [vmem:[%s0 + $0x50] sm:$0xff]
  %v27 = vld [vmem:[%s0 + $0x58] sm:$0xff]
  %v28 = vld [vmem:[%s0 + $0x60] sm:$0xff]
  %v29 = vld [vmem:[%s0 + $0x68] sm:$0xff]
  %v30 = vld [vmem:[%s0 + $0x70] sm:$0xff]
  %v31 = vld [vmem:[%s0 + $0x78] sm:$0xff]
  %v32 = vld [vmem:[%s0 + $0x80] sm:$0xff]
  %v33 = vld [vmem:[%s0 + $0x88] sm:$0xff]
  %v34 = vld [vmem:[%s0 + $0x90] sm:$0xff]
  %v35 = vld [vmem:[%s0 + $0x98] sm:$0xff]
  %v36 = vld [vmem:[%s0 + $0xa0] sm:$0xff]
  %v37 = vld [vmem:[%s0 + $0xa8] sm:$0xff]
  %v38 = vld [vmem:[%s0 + $0xb0] sm:$0xff]
  %v39 = vld [vmem:[%s0 + $0xb8] sm:$0xff]
  %v40 = vld [vmem:[%s0 + $0xc0] sm:$0xff]
  %v41 = vld [vmem:[%s0 + $0xc8] sm:$0xff]
  %v42 = vld [vmem:[%s0 + $0xd0] sm:$0xff]
  %v43 = vld [vmem:[%s0 + $0xd8] sm:$0xff]
  %45 = vset.pattern.permute.xlu0 0
  %46 = vperm.xlu0 %45, %v14
  %v47 = vpop.permute.xlu0 %46
  %v49 = vmul.f32 %v16, %v47
  %v50 = vmul.f32 %v17, %v47
  %v51 = vmul.f32 %v18, %v47
  %v52 = vmul.f32 %v19, %v47
  %v53 = vmul.f32 %v20, %v47
  %v54 = vmul.f32 %v21, %v47
  %v55 = vmul.f32 %v22, %v47
  %v56 = vmul.f32 %v23, %v47
  %v57 = vmul.f32 %v24, %v47
  %v58 = vmul.f32 %v25, %v47
  %v59 = vmul.f32 %v26, %v47
  %v60 = vmul.f32 %v27, %v47
  %v61 = vmul.f32 %v28, %v47
  %v62 = vmul.f32 %v29, %v47
  %v63 = vmul.f32 %v30, %v47
  %v64 = vmul.f32 %v31, %v47
  %v65 = vmul.f32 %v32, %v47
  %v66 = vmul.f32 %v33, %v47
  %v67 = vmul.f32 %v34, %v47
  %v68 = vmul.f32 %v35, %v47
  %v69 = vmul.f32 %v36, %v47
  %v70 = vmul.f32 %v37, %v47
  %v71 = vmul.f32 %v38, %v47
  %v72 = vmul.f32 %v39, %v47
  %v73 = vmul.f32 %v40, %v47
  %v74 = vmul.f32 %v41, %v47
  %v75 = vmul.f32 %v42, %v47
  %v76 = vmul.f32 %v43, %v47
  %78 = vset.pattern.permute.xlu0 0
  %79 = vperm.xlu0 %78, %v15
  %v80 = vpop.permute.xlu0 %79
  %v82 = vadd.f32 %v49, %v80
  %v83 = vadd.f32 %v50, %v80
  %v84 = vadd.f32 %v51, %v80
  %v85 = vadd.f32 %v52, %v80
  %v86 = vadd.f32 %v53, %v80
  %v87 = vadd.f32 %v54, %v80
  %v88 = vadd.f32 %v55, %v80
  %v89 = vadd.f32 %v56, %v80
  %v90 = vadd.f32 %v57, %v80
  %v91 = vadd.f32 %v58, %v80
  %v92 = vadd.f32 %v59, %v80
  %v93 = vadd.f32 %v60, %v80
  %v94 = vadd.f32 %v61, %v80
  %v95 = vadd.f32 %v62, %v80
  %v96 = vadd.f32 %v63, %v80
  %v97 = vadd.f32 %v64, %v80
  %v98 = vadd.f32 %v65, %v80
  %v99 = vadd.f32 %v66, %v80
  %v100 = vadd.f32 %v67, %v80
  %v101 = vadd.f32 %v68, %v80
  %v102 = vadd.f32 %v69, %v80
  %v103 = vadd.f32 %v70, %v80
  %v104 = vadd.f32 %v71, %v80
  %v105 = vadd.f32 %v72, %v80
  %v106 = vadd.f32 %v73, %v80
  %v107 = vadd.f32 %v74, %v80
  %v108 = vadd.f32 %v75, %v80
  %v109 = vadd.f32 %v76, %v80
  %v110 = vmax.f32 %v82, 0.0
  %v111 = vmax.f32 %v83, 0.0
  %v112 = vmax.f32 %v84, 0.0
  %v113 = vmax.f32 %v85, 0.0
  %v114 = vmax.f32 %v86, 0.0
  %v115 = vmax.f32 %v87, 0.0
  %v116 = vmax.f32 %v88, 0.0
  %v117 = vmax.f32 %v89, 0.0
  %v118 = vmax.f32 %v90, 0.0
  %v119 = vmax.f32 %v91, 0.0
  %v120 = vmax.f32 %v92, 0.0
  %v121 = vmax.f32 %v93, 0.0
  %v122 = vmax.f32 %v94, 0.0
  %v123 = vmax.f32 %v95, 0.0
  %v124 = vmax.f32 %v96, 0.0
  %v125 = vmax.f32 %v97, 0.0
  %v126 = vmax.f32 %v98, 0.0
  %v127 = vmax.f32 %v99, 0.0
  %v128 = vmax.f32 %v100, 0.0
  %v129 = vmax.f32 %v101, 0.0
  %v130 = vmax.f32 %v102, 0.0
  %v131 = vmax.f32 %v103, 0.0
  %v132 = vmax.f32 %v104, 0.0
  %v133 = vmax.f32 %v105, 0.0
  %v134 = vmax.f32 %v106, 0.0
  %v135 = vmax.f32 %v107, 0.0
  %v136 = vmax.f32 %v108, 0.0
  %v137 = vmax.f32 %v109, 0.0
  %138 = vst [vmem:[%s3] sm:$0xff] %v110
  %139 = vst [vmem:[%s3 + $0x8] sm:$0xff] %v111
  %140 = vst [vmem:[%s3 + $0x10] sm:$0xff] %v112
  %141 = vst [vmem:[%s3 + $0x18] sm:$0xff] %v113
  %142 = vst [vmem:[%s3 + $0x20] sm:$0xff] %v114
  %143 = vst [vmem:[%s3 + $0x28] sm:$0xff] %v115
  %144 = vst [vmem:[%s3 + $0x30] sm:$0xff] %v116
  %145 = vst [vmem:[%s3 + $0x38] sm:$0xff] %v117
  %146 = vst [vmem:[%s3 + $0x40] sm:$0xff] %v118
  %147 = vst [vmem:[%s3 + $0x48] sm:$0xff] %v119
  %148 = vst [vmem:[%s3 + $0x50] sm:$0xff] %v120
  %149 = vst [vmem:[%s3 + $0x58] sm:$0xff] %v121
  %150 = vst [vmem:[%s3 + $0x60] sm:$0xff] %v122
  %151 = vst [vmem:[%s3 + $0x68] sm:$0xff] %v123
  %152 = vst [vmem:[%s3 + $0x70] sm:$0xff] %v124
  %153 = vst [vmem:[%s3 + $0x78] sm:$0xff] %v125
  %154 = vst [vmem:[%s3 + $0x80] sm:$0xff] %v126
  %155 = vst [vmem:[%s3 + $0x88] sm:$0xff] %v127
  %156 = vst [vmem:[%s3 + $0x90] sm:$0xff] %v128
  %157 = vst [vmem:[%s3 + $0x98] sm:$0xff] %v129
  %158 = vst [vmem:[%s3 + $0xa0] sm:$0xff] %v130
  %159 = vst [vmem:[%s3 + $0xa8] sm:$0xff] %v131
  %160 = vst [vmem:[%s3 + $0xb0] sm:$0xff] %v132
  %161 = vst [vmem:[%s3 + $0xb8] sm:$0xff] %v133
  %162 = vst [vmem:[%s3 + $0xc0] sm:$0xff] %v134
  %163 = vst [vmem:[%s3 + $0xc8] sm:$0xff] %v135
  %164 = vst [vmem:[%s3 + $0xd0] sm:$0xff] %v136
  %165 = vst [vmem:[%s3 + $0xd8] sm:$0xff] %v137
  // Predicated region
  $region14: #{temporal_block_forward.3} parent=0 // pred_check
    _
  $region15: #{temporal_block_forward.3} parent=0 // pred_check_branch
    %167 = sbr.rel (0) target = $region17
  $region16: #{temporal_block_forward.3} parent=0 // pred_region
    _
  $region17: #{temporal_block_forward.3} parent=0 // pred_fallthru
    _
  // Predicated region
  $region18: #{temporal_block_forward.3} parent=0 // pred_check
    _
  $region19: #{temporal_block_forward.3} parent=0 // pred_check_branch
    %169 = sbr.rel (0) target = $region21
  $region20: #{temporal_block_forward.3} parent=0 // pred_region
    _
  $region21: #{temporal_block_forward.3} parent=0 // pred_fallthru
    _

// kernel: temporal_block_forward.2
$region0: #{temporal_block_forward.2}
  #allocation0 [shape = 'u32[]', space=smem, size = 0x4, offset = 0x4, fixed_abs, tag = 'smem constant byte address 0x4 - core index']
  #allocation1 [shape = 'u32[144,128]{1,0:T(1,128)}', space=vmem, size = 0x12000, scoped, tag = 'internal scratch']
  #allocation2 [shape = 'f32[12,512]{1,0:T(8,128)}', space=vmem, size = 0x8000, scoped, tag = 'scratch operand']
  %s0 = inlined_call_operand.vmem [shape: bf16[8,12], index: 0, kind: input, shape index: {}]
  %s1 = inlined_call_operand.vmem [shape: bf16[15,4,512], index: 1, kind: input, shape index: {}, may-alias: {1,2,3}]
  %s2 = inlined_call_operand.vmem [shape: bf16[15,4,512], index: 2, kind: input, shape index: {}, may-alias: {1,2,3}]
  %s3 = inlined_call_operand.vmem [shape: bf16[15,4,512], index: 3, kind: input, shape index: {}, may-alias: {1,2,3}]
  %s4 = inlined_call_operand.vmem [shape: f32[7,8,512], index: 4, kind: output, shape index: {0}]
  %s5 = inlined_call_operand.vmem [shape: f32[7,8,2], index: 5, kind: output, shape index: {1}]
  %6 = xla_tuple %s4, %s5
  %s7 = sld [smem:[#allocation0]]
  $region61: #{temporal_block_forward.2} parent=0
    _
  %s9 = ssub.s32 1, %s7
  %s10 = scalar_select 0, %s9, %s7
  loop: start=0, step=1, limit=9
  $region2: #{temporal_block_forward.2} parent=0 // loop_pre_header
    _
  $region3: #{temporal_block_forward.2} parent=0 // loop_header
    %s12 = sphi 0, %s16
    %p13 = scmp.ge.s32.totalorder %s12, 9
    %s19 = sphi 0, %s31
    %s20 = sphi 0, %s27
    %s21 = sphi 0, %s19
    %s22 = sphi 0, %s20
    %s23 = sphi 0, %s21
    %s24 = sphi 0, %s22
    %s32 = sphi 0, %s32
    %s34 = sphi 0, %s32
    %s35 = sphi 0, %s34
    %s49 = sphi 0, %s35
    %s59 = sphi 0, %s61
    %s62 = sphi 0, %s59
    %s63 = sphi 0, %s62
    %s79 = sphi 0, %s63
    %s91 = sphi 0, %s93
    %s94 = sphi 0, %s91
    %s95 = sphi 0, %s94
    %s111 = sphi 0, %s95
    %s123 = sphi 0, %s125
    %s126 = sphi 0, %s123
    %s127 = sphi 0, %s126
    %s143 = sphi 0, %s127
    %s151 = sphi 0, %s153
    %s154 = sphi 0, %s151
    %s155 = sphi 0, %s154
    %s171 = sphi 0, %s155
    %s177 = sphi 0, %s179
    %s180 = sphi 0, %s177
    %s181 = sphi 0, %s180
    %s197 = sphi 0, %s181
  $region4: #{temporal_block_forward.2} parent=0 // loop_header_branch
    %15 = sbr.rel (%p13) target = $region8
  $region5: #{temporal_block_forward.2} parent=0 // loop_body
    %s17 = ssub.s32 %s12, 1
    %s18 = ssub.s32 %s12, 2
    %s25 = sadd.s32 1, %s20
    %p26 = scmp.ge.s32.totalorder %s25, 1
    %s27 = scalar_select %p26, 0, %s25
    %s28 = sadd.s32 1, %s19
    %s29 = scalar_select %p26, %s28, %s19
    %p30 = scmp.ge.s32.totalorder %s29, 7
    %s31 = scalar_select %p30, 0, %s29
    %s33 = sadd.s32 %s32, 1
    %p36 = scmp.eq.s32.totalorder %s12, 6
    %p37 = scmp.ne.s32.totalorder %s32, %s34
    %p38 = scmp.eq.s32.totalorder %s12, 0
    %p39 = por %p37, %p38
    %p40 = scmp.ne.s32.totalorder %s32, %s34
    %p41 = scmp.eq.s32.totalorder %s17, 6
    %p42 = por %p40, %p41
    %p43 = scmp.ne.s32.totalorder %s34, %s35
    %p44 = scmp.eq.s32.totalorder %s17, 0
    %p45 = por %p43, %p44
    %p46 = scmp.ne.s32.totalorder %s34, %s35
    %p47 = scmp.eq.s32.totalorder %s18, 6
    %p48 = por %p46, %p47
    %p50 = scmp.ne.s32.totalorder %s35, %s49
    %p51 = scmp.eq.s32.totalorder %s18, 0
    %p52 = por %p50, %p51
    %s53 = smul.u32 %s19, 2
    %s54 = smul.u32 %s31, 2
    %s55 = ssub.s32 %s53, %s54
    %s56 = ssub.s32 %s20, %s27
    %s57 = sor.u32 %s55, %s56
    %p58 = scmp.eq.s32.totalorder %s57, 0
    %s60 = sadd.s32 %s59, 1
    %s61 = scalar_select %p58, %s59, %s60
    %p64 = pneg %p58
    %p65 = scmp.eq.s32.totalorder %s12, 6
    %p66 = por %p64, %p65
    %p67 = scmp.ne.s32.totalorder %s59, %s62
    %p68 = scmp.eq.s32.totalorder %s12, 0
    %p69 = por %p67, %p68
    %p70 = scmp.ne.s32.totalorder %s59, %s62
    %p71 = scmp.eq.s32.totalorder %s17, 6
    %p72 = por %p70, %p71
    %p73 = scmp.ne.s32.totalorder %s62, %s63
    %p74 = scmp.eq.s32.totalorder %s17, 0
    %p75 = por %p73, %p74
    %p76 = scmp.ne.s32.totalorder %s62, %s63
    %p77 = scmp.eq.s32.totalorder %s18, 6
    %p78 = por %p76, %p77
    %p80 = scmp.ne.s32.totalorder %s63, %s79
    %p81 = scmp.eq.s32.totalorder %s18, 0
    %p82 = por %p80, %p81
    %s83 = smul.u32 %s19, 2
    %s84 = sadd.s32 %s83, 1
    %s85 = smul.u32 %s31, 2
    %s86 = sadd.s32 %s85, 1
    %s87 = ssub.s32 %s84, %s86
    %s88 = ssub.s32 %s20, %s27
    %s89 = sor.u32 %s87, %s88
    %p90 = scmp.eq.s32.totalorder %s89, 0
    %s92 = sadd.s32 %s91, 1
    %s93 = scalar_select %p90, %s91, %s92
    %p96 = pneg %p90
    %p97 = scmp.eq.s32.totalorder %s12, 6
    %p98 = por %p96, %p97
    %p99 = scmp.ne.s32.totalorder %s91, %s94
    %p100 = scmp.eq.s32.totalorder %s12, 0
    %p101 = por %p99, %p100
    %p102 = scmp.ne.s32.totalorder %s91, %s94
    %p103 = scmp.eq.s32.totalorder %s17, 6
    %p104 = por %p102, %p103
    %p105 = scmp.ne.s32.totalorder %s94, %s95
    %p106 = scmp.eq.s32.totalorder %s17, 0
    %p107 = por %p105, %p106
    %p108 = scmp.ne.s32.totalorder %s94, %s95
    %p109 = scmp.eq.s32.totalorder %s18, 6
    %p110 = por %p108, %p109
    %p112 = scmp.ne.s32.totalorder %s95, %s111
    %p113 = scmp.eq.s32.totalorder %s18, 0
    %p114 = por %p112, %p113
    %s115 = smul.u32 %s19, 2
    %s116 = sadd.s32 %s115, 2
    %s117 = smul.u32 %s31, 2
    %s118 = sadd.s32 %s117, 2
    %s119 = ssub.s32 %s116, %s118
    %s120 = ssub.s32 %s20, %s27
    %s121 = sor.u32 %s119, %s120
    %p122 = scmp.eq.s32.totalorder %s121, 0
    %s124 = sadd.s32 %s123, 1
    %s125 = scalar_select %p122, %s123, %s124
    %p128 = pneg %p122
    %p129 = scmp.eq.s32.totalorder %s12, 6
    %p130 = por %p128, %p129
    %p131 = scmp.ne.s32.totalorder %s123, %s126
    %p132 = scmp.eq.s32.totalorder %s12, 0
    %p133 = por %p131, %p132
    %p134 = scmp.ne.s32.totalorder %s123, %s126
    %p135 = scmp.eq.s32.totalorder %s17, 6
    %p136 = por %p134, %p135
    %p137 = scmp.ne.s32.totalorder %s126, %s127
    %p138 = scmp.eq.s32.totalorder %s17, 0
    %p139 = por %p137, %p138
    %p140 = scmp.ne.s32.totalorder %s126, %s127
    %p141 = scmp.eq.s32.totalorder %s18, 6
    %p142 = por %p140, %p141
    %p144 = scmp.ne.s32.totalorder %s127, %s143
    %p145 = scmp.eq.s32.totalorder %s18, 0
    %p146 = por %p144, %p145
    %s147 = ssub.s32 %s19, %s31
    %s148 = ssub.s32 %s20, %s27
    %s149 = sor.u32 %s147, %s148
    %p150 = scmp.eq.s32.totalorder %s149, 0
    %s152 = sadd.s32 %s151, 1
    %s153 = scalar_select %p150, %s151, %s152
    %p156 = pneg %p150
    %p157 = scmp.eq.s32.totalorder %s12, 6
    %p158 = por %p156, %p157
    %p159 = scmp.ne.s32.totalorder %s151, %s154
    %p160 = scmp.eq.s32.totalorder %s12, 0
    %p161 = por %p159, %p160
    %p162 = scmp.ne.s32.totalorder %s151, %s154
    %p163 = scmp.eq.s32.totalorder %s17, 6
    %p164 = por %p162, %p163
    %p165 = scmp.ne.s32.totalorder %s154, %s155
    %p166 = scmp.eq.s32.totalorder %s17, 0
    %p167 = por %p165, %p166
    %p168 = scmp.ne.s32.totalorder %s154, %s155
    %p169 = scmp.eq.s32.totalorder %s18, 6
    %p170 = por %p168, %p169
    %p172 = scmp.ne.s32.totalorder %s155, %s171
    %p173 = scmp.eq.s32.totalorder %s18, 0
    %p174 = por %p172, %p173
    %s175 = ssub.s32 %s19, %s31
    %p176 = scmp.eq.s32.totalorder %s175, 0
    %s178 = sadd.s32 %s177, 1
    %s179 = scalar_select %p176, %s177, %s178
    %p182 = pneg %p176
    %p183 = scmp.eq.s32.totalorder %s12, 6
    %p184 = por %p182, %p183
    %p185 = scmp.ne.s32.totalorder %s177, %s180
    %p186 = scmp.eq.s32.totalorder %s12, 0
    %p187 = por %p185, %p186
    %p188 = scmp.ne.s32.totalorder %s177, %s180
    %p189 = scmp.eq.s32.totalorder %s17, 6
    %p190 = por %p188, %p189
    %p191 = scmp.ne.s32.totalorder %s180, %s181
    %p192 = scmp.eq.s32.totalorder %s17, 0
    %p193 = por %p191, %p192
    %p194 = scmp.ne.s32.totalorder %s180, %s181
    %p195 = scmp.eq.s32.totalorder %s18, 6
    %p196 = por %p194, %p195
    %p198 = scmp.ne.s32.totalorder %s181, %s197
    %p199 = scmp.eq.s32.totalorder %s18, 0
    %p200 = por %p198, %p199
    %p201 = scmp.le.s32.totalorder 1, %s12
    %p202 = scmp.lt.s32.totalorder %s12, 8
    %p203 = pnand %p201, %p202
    %p204 = pneg %p203
    // Predicated region
    $region9: #{temporal_block_forward.2} parent=5 // pred_check
      _
    $region10: #{temporal_block_forward.2} parent=5 // pred_check_branch
      %206 = sbr.rel (%p203) target = $region12
    $region11: #{temporal_block_forward.2} parent=5 // pred_region
      %s207 = ssub.s32 %s12, 1
      // Predicated region
      $region13: #{temporal_block_forward.2} parent=11 // pred_check
        %p208 = pneg %p45
      $region14: #{temporal_block_forward.2} parent=11 // pred_check_branch
        %210 = sbr.rel (%p208) target = $region16
      $region15: #{temporal_block_forward.2} parent=11 // pred_region
        _
      $region16: #{temporal_block_forward.2} parent=11 // pred_fallthru
        _
    $region12: #{temporal_block_forward.2} parent=5 // pred_fallthru
      _
    %p211 = scmp.lt.s32.totalorder %s12, 7
    // Predicated region
    $region17: #{temporal_block_forward.2} parent=5 // pred_check
      %p212 = pneg %p211
    $region18: #{temporal_block_forward.2} parent=5 // pred_check_branch
      %214 = sbr.rel (%p212) target = $region20
    $region19: #{temporal_block_forward.2} parent=5 // pred_region
      // Predicated region
      $region21: #{temporal_block_forward.2} parent=19 // pred_check
        %p215 = pneg %p69
      $region22: #{temporal_block_forward.2} parent=19 // pred_check_branch
        %217 = sbr.rel (%p215) target = $region24
      $region23: #{temporal_block_forward.2} parent=19 // pred_region
        %s218 = smul.u32 %s19, 2
        %s219 = smul.u32 4, %s20
        %p220 = scmp.lt.s32.totalorder %s218, 14
        %s221 = scalar_select %p220, %s218, 14
        %p222 = scmp.lt.s32.totalorder %s219, 3
        %s223 = scalar_select %p222, %s219, 3
        %s224 = smul.addr %s221, 4
        %s225 = sadd.s32 %s223, %s224
        %s226 = smul.addr %s225, 2
        %s227 = scalar_lea.vmem %s1, %s226
        %s228 = smul.u32 %s19, 2
        %s229 = smul.u32 4, %s20
      $region24: #{temporal_block_forward.2} parent=19 // pred_fallthru
        _
      // Predicated region
      $region25: #{temporal_block_forward.2} parent=19 // pred_check
        %p230 = pneg %p101
      $region26: #{temporal_block_forward.2} parent=19 // pred_check_branch
        %232 = sbr.rel (%p230) target = $region28
      $region27: #{temporal_block_forward.2} parent=19 // pred_region
        %s233 = smul.u32 %s19, 2
        %s234 = sadd.s32 %s233, 1
        %s235 = smul.u32 4, %s20
        %p236 = scmp.lt.s32.totalorder %s234, 14
        %s237 = scalar_select %p236, %s234, 14
        %p238 = scmp.lt.s32.totalorder %s235, 3
        %s239 = scalar_select %p238, %s235, 3
        %s240 = smul.addr %s237, 4
        %s241 = sadd.s32 %s239, %s240
        %s242 = smul.addr %s241, 2
        %s243 = scalar_lea.vmem %s2, %s242
        %s244 = smul.u32 %s19, 2
        %s245 = sadd.s32 %s244, 1
        %s246 = smul.u32 4, %s20
      $region28: #{temporal_block_forward.2} parent=19 // pred_fallthru
        _
      // Predicated region
      $region29: #{temporal_block_forward.2} parent=19 // pred_check
        %p247 = pneg %p133
      $region30: #{temporal_block_forward.2} parent=19 // pred_check_branch
        %249 = sbr.rel (%p247) target = $region32
      $region31: #{temporal_block_forward.2} parent=19 // pred_region
        %s250 = smul.u32 %s19, 2
        %s251 = sadd.s32 %s250, 2
        %s252 = smul.u32 4, %s20
        %p253 = scmp.lt.s32.totalorder %s251, 14
        %s254 = scalar_select %p253, %s251, 14
        %p255 = scmp.lt.s32.totalorder %s252, 3
        %s256 = scalar_select %p255, %s252, 3
        %s257 = smul.addr %s254, 4
        %s258 = sadd.s32 %s256, %s257
        %s259 = smul.addr %s258, 2
        %s260 = scalar_lea.vmem %s3, %s259
        %s261 = smul.u32 %s19, 2
        %s262 = sadd.s32 %s261, 2
        %s263 = smul.u32 4, %s20
      $region32: #{temporal_block_forward.2} parent=19 // pred_fallthru
        _
    $region20: #{temporal_block_forward.2} parent=5 // pred_fallthru
      _
    %p264 = scmp.le.s32.totalorder 1, %s12
    %p265 = scmp.lt.s32.totalorder %s12, 8
    %p266 = pnand %p264, %p265
    %p267 = pneg %p266
    // Predicated region
    $region33: #{temporal_block_forward.2} parent=5 // pred_check
      _
    $region34: #{temporal_block_forward.2} parent=5 // pred_check_branch
      %269 = sbr.rel (%p266) target = $region36
    $region35: #{temporal_block_forward.2} parent=5 // pred_region
      %s270 = ssub.s32 %s12, 1
      %p271 = pneg %p45
      %p272 = pneg %p42
      %s273 = smul.u32 %s21, 2
      %s274 = smul.u32 4, %s22
      %p275 = scmp.lt.s32.totalorder %s273, 14
      %s276 = scalar_select %p275, %s273, 14
      %p277 = scmp.lt.s32.totalorder %s274, 3
      %s278 = scalar_select %p277, %s274, 3
      %s279 = smul.addr %s276, 4
      %s280 = sadd.s32 %s278, %s279
      %s281 = smul.addr %s280, 2
      %s282 = scalar_lea.vmem %s1, %s281
      %p283 = pneg %p75
      %p284 = pneg %p72
      %s285 = smul.u32 %s21, 2
      %s286 = sadd.s32 %s285, 1
      %s287 = smul.u32 4, %s22
      %p288 = scmp.lt.s32.totalorder %s286, 14
      %s289 = scalar_select %p288, %s286, 14
      %p290 = scmp.lt.s32.totalorder %s287, 3
      %s291 = scalar_select %p290, %s287, 3
      %s292 = smul.addr %s289, 4
      %s293 = sadd.s32 %s291, %s292
      %s294 = smul.addr %s293, 2
      %s295 = scalar_lea.vmem %s2, %s294
      %p296 = pneg %p107
      %p297 = pneg %p104
      %s298 = smul.u32 %s21, 2
      %s299 = sadd.s32 %s298, 2
      %s300 = smul.u32 4, %s22
      %p301 = scmp.lt.s32.totalorder %s299, 14
      %s302 = scalar_select %p301, %s299, 14
      %p303 = scmp.lt.s32.totalorder %s300, 3
      %s304 = scalar_select %p303, %s300, 3
      %s305 = smul.addr %s302, 4
      %s306 = sadd.s32 %s304, %s305
      %s307 = smul.addr %s306, 2
      %s308 = scalar_lea.vmem %s3, %s307
      %p309 = pneg %p139
      %p310 = pneg %p136
      %p311 = pneg %p167
      %p312 = pneg %p164
      %s313 = smul.u32 4, %s22
      %p314 = scmp.lt.s32.totalorder %s21, 6
      %s315 = scalar_select %p314, %s21, 6
      %p316 = scmp.lt.s32.totalorder %s313, 3
      %s317 = scalar_select %p316, %s313, 3
      %s318 = smul.addr %s315, 4
      %s319 = sadd.s32 %s317, %s318
      %s320 = smul.addr %s319, 8
      %s321 = scalar_lea.vmem %s4, %s320
      %p322 = pneg %p193
      %p323 = pneg %p190
      %p324 = scmp.lt.s32.totalorder %s21, 6
      %s325 = scalar_select %p324, %s21, 6
      %s326 = smul.addr %s325, 8
      %s327 = scalar_lea.vmem %s5, %s326
      %s328 = smul.u32 %s21, 2
      %s329 = smul.u32 4, %s22
      %p330 = scmp.lt.s32.totalorder %s328, 14
      %s331 = scalar_select %p330, %s328, 14
      %p332 = scmp.lt.s32.totalorder %s329, 3
      %s333 = scalar_select %p332, %s329, 3
      %s334 = smul.addr %s331, 4
      %s335 = sadd.s32 %s333, %s334
      %s336 = smul.addr %s335, 2
      %s337 = scalar_lea.vmem %s1, %s336
      %s338 = smul.u32 %s21, 2
      %s339 = smul.u32 4, %s22
      %s340 = smul.u32 %s21, 2
      %s341 = sadd.s32 %s340, 1
      %s342 = smul.u32 4, %s22
      %p343 = scmp.lt.s32.totalorder %s341, 14
      %s344 = scalar_select %p343, %s341, 14
      %p345 = scmp.lt.s32.totalorder %s342, 3
      %s346 = scalar_select %p345, %s342, 3
      %s347 = smul.addr %s344, 4
      %s348 = sadd.s32 %s346, %s347
      %s349 = smul.addr %s348, 2
      %s350 = scalar_lea.vmem %s2, %s349
      %s351 = smul.u32 %s21, 2
      %s352 = sadd.s32 %s351, 1
      %s353 = smul.u32 4, %s22
      %s354 = smul.u32 %s21, 2
      %s355 = sadd.s32 %s354, 2
      %s356 = smul.u32 4, %s22
      %p357 = scmp.lt.s32.totalorder %s355, 14
      %s358 = scalar_select %p357, %s355, 14
      %p359 = scmp.lt.s32.totalorder %s356, 3
      %s360 = scalar_select %p359, %s356, 3
      %s361 = smul.addr %s358, 4
      %s362 = sadd.s32 %s360, %s361
      %s363 = smul.addr %s362, 2
      %s364 = scalar_lea.vmem %s3, %s363
      %s365 = smul.u32 %s21, 2
      %s366 = sadd.s32 %s365, 2
      %s367 = smul.u32 4, %s22
      %s368 = smul.u32 4, %s22
      %p369 = scmp.lt.s32.totalorder %s21, 6
      %s370 = scalar_select %p369, %s21, 6
      %p371 = scmp.lt.s32.totalorder %s368, 3
      %s372 = scalar_select %p371, %s368, 3
      %s373 = smul.addr %s370, 4
      %s374 = sadd.s32 %s372, %s373
      %s375 = smul.addr %s374, 8
      %s376 = scalar_lea.vmem %s4, %s375
      %s377 = smul.u32 4, %s22
      %p378 = scmp.lt.s32.totalorder %s21, 6
      %s379 = scalar_select %p378, %s21, 6
      %s380 = smul.addr %s379, 8
      %s381 = scalar_lea.vmem %s5, %s380
      %p383 = scmp.eq.s32.totalorder %s22, 0
      // Predicated region
      $region37: #{temporal_block_forward.2} parent=35 // pred_check
        %p384 = pneg %p383
      $region38: #{temporal_block_forward.2} parent=35 // pred_check_branch
        %386 = sbr.rel (%p384) target = $region40
      $region39: #{temporal_block_forward.2} parent=35 // pred_region
        %vm387 = vcmask 15360
        %388 = vst.msk [vmem:[%s381] sm:$0xff] %vm387, 0.0
      $region40: #{temporal_block_forward.2} parent=35 // pred_fallthru
        _
      %v389 = vld [vmem:[%s337] sm:$0xff]
      %v390 = vunpack.c.l.bf16 %v389
      %v391 = vunpack.c.h.bf16 %v389
      %v394 = vcombine.high %v390, %v390
      %v395 = vcombine.high %v391, %v391
      %398 = vst [vmem:[#allocation2] sm:$0xf] %v390
      %399 = vst [vmem:[#allocation2 + $0x8] sm:$0xf] %v394
      %400 = vst [vmem:[#allocation2 + $0x10] sm:$0xf] %v391
      %401 = vst [vmem:[#allocation2 + $0x18] sm:$0xf] %v395
      %v402 = vld [vmem:[%s350] sm:$0xff]
      %v403 = vunpack.c.l.bf16 %v402
      %v404 = vunpack.c.h.bf16 %v402
      %v407 = vcombine.low %v403, %v403
      %v408 = vcombine.low %v404, %v404
      %411 = vst [vmem:[#allocation2] sm:$0xf0] %v407
      %412 = vst [vmem:[#allocation2 + $0x8] sm:$0xf0] %v403
      %413 = vst [vmem:[#allocation2 + $0x10] sm:$0xf0] %v408
      %414 = vst [vmem:[#allocation2 + $0x18] sm:$0xf0] %v404
      %v415 = vld [vmem:[%s364] sm:$0xff]
      %v416 = vunpack.c.l.bf16 %v415
      %v417 = vunpack.c.h.bf16 %v415
      %v420 = vcombine.high %v416, %v416
      %v421 = vcombine.high %v417, %v417
      %424 = vst [vmem:[#allocation2 + $0x20] sm:$0xf] %v416
      %425 = vst [vmem:[#allocation2 + $0x28] sm:$0xf] %v420
      %426 = vst [vmem:[#allocation2 + $0x30] sm:$0xf] %v417
      %427 = vst [vmem:[#allocation2 + $0x38] sm:$0xf] %v421
      %v428 = vld [vmem:[#allocation2] sm:$0xff]
      %v429 = vld [vmem:[#allocation2 + $0x8] sm:$0xff]
      %v430 = vld [vmem:[#allocation2 + $0x10] sm:$0xff]
      %v431 = vld [vmem:[#allocation2 + $0x18] sm:$0xff]
      %v432 = vld [vmem:[#allocation2 + $0x20] sm:$0xf]
      %v433 = vld [vmem:[#allocation2 + $0x28] sm:$0xf]
      %v434 = vld [vmem:[#allocation2 + $0x30] sm:$0xf]
      %v435 = vld [vmem:[#allocation2 + $0x38] sm:$0xf]
      %v436 = vpack.c.bf16 %v432, %v428
      %v437 = vpack.c.bf16 %v433, %v429
      %v438 = vpack.c.bf16 %v434, %v430
      %v439 = vpack.c.bf16 %v435, %v431
      %v440 = vld [vmem:[%s0] sm:$0xf]
      %vm441 = vcmask 97280
      %v443 = vsel %vm441, %v440, 0
      %vm445 = vcmask 1045504
      %v447 = vsel %vm445, %v436, 0
      %v450 = vsel %vm445, %v437, 0
      %v453 = vsel %vm445, %v438, 0
      %v456 = vsel %vm445, %v439, 0
      %458 = vmatprep.subr.bf16.mxu0 %v450
      %459 = vmatpush1.bf16.msra.mxu0 %v447
      %460 = vmatprep.subr.bf16.mxu0 0
      %461 = vmatpush1.bf16.msra.mxu0 0
      %462 = vmatprep.subr.bf16.mxu0 0
      %463 = vmatpush1.bf16.msra.mxu0 0
      %464 = vmatprep.subr.bf16.mxu0 0
      %465 = vmatpush1.bf16.msra.mxu0 0
      %466 = vmatprep.subr.bf16.mxu0 0
      %467 = vmatpush1.bf16.msra.mxu0 0
      %468 = vmatprep.subr.bf16.mxu0 0
      %469 = vmatpush1.bf16.msra.mxu0 0
      %470 = vmatprep.subr.bf16.mxu0 0
      %471 = vmatpush1.bf16.msra.mxu0 0
      %472 = vmatprep.subr.bf16.mxu0 0
      %473 = vmatpush1.bf16.msra.mxu0 0
      %474 = vmatprep.subr.bf16.mxu0 0
      %475 = vmatpush1.bf16.msra.mxu0 0
      %476 = vmatprep.subr.bf16.mxu0 0
      %477 = vmatpush1.bf16.msra.mxu0 0
      %478 = vmatprep.subr.bf16.mxu0 0
      %479 = vmatpush1.bf16.msra.mxu0 0
      %480 = vmatprep.subr.bf16.mxu0 0
      %481 = vmatpush1.bf16.msra.mxu0 0
      %482 = vmatprep.subr.bf16.mxu0 0
      %483 = vmatpush1.bf16.msra.mxu0 0
      %484 = vmatprep.subr.bf16.mxu0 0
      %485 = vmatpush1.bf16.msra.mxu0 0
      %486 = vmatprep.subr.bf16.mxu0 0
      %487 = vmatpush1.bf16.msra.mxu0 0
      %488 = vmatprep.subr.bf16.mxu0 0
      %489 = vmatpush1.bf16.msra.mxu0 0
      %490 = vmatprep.mubr.bf16.mxu0 0
      %491 = vmatmul.mubr.bf16.gmra.mrb[0].mxu0 %v443
      %v492 = vpop.f32.mrb[0].mxu0
      %v493 = vadd.f32 0.0, %v492
      %v494 = vpop.f32.mrb[0].mxu0
      %v495 = vadd.f32 0.0, %v494
      %v496 = vpop.f32.mrb[0].mxu0
      %v497 = vpop.f32.mrb[0].mxu0
      %498 = vdwg.mxu0
      %499 = vmatprep.subr.bf16.mxu0 %v456
      %500 = vmatpush1.bf16.msra.mxu0 %v453
      %501 = vmatprep.subr.bf16.mxu0 0
      %502 = vmatpush1.bf16.msra.mxu0 0
      %503 = vmatprep.subr.bf16.mxu0 0
      %504 = vmatpush1.bf16.msra.mxu0 0
      %505 = vmatprep.subr.bf16.mxu0 0
      %506 = vmatpush1.bf16.msra.mxu0 0
      %507 = vmatprep.subr.bf16.mxu0 0
      %508 = vmatpush1.bf16.msra.mxu0 0
      %509 = vmatprep.subr.bf16.mxu0 0
      %510 = vmatpush1.bf16.msra.mxu0 0
      %511 = vmatprep.subr.bf16.mxu0 0
      %512 = vmatpush1.bf16.msra.mxu0 0
      %513 = vmatprep.subr.bf16.mxu0 0
      %514 = vmatpush1.bf16.msra.mxu0 0
      %515 = vmatprep.subr.bf16.mxu0 0
      %516 = vmatpush1.bf16.msra.mxu0 0
      %517 = vmatprep.subr.bf16.mxu0 0
      %518 = vmatpush1.bf16.msra.mxu0 0
      %519 = vmatprep.subr.bf16.mxu0 0
      %520 = vmatpush1.bf16.msra.mxu0 0
      %521 = vmatprep.subr.bf16.mxu0 0
      %522 = vmatpush1.bf16.msra.mxu0 0
      %523 = vmatprep.subr.bf16.mxu0 0
      %524 = vmatpush1.bf16.msra.mxu0 0
      %525 = vmatprep.subr.bf16.mxu0 0
      %526 = vmatpush1.bf16.msra.mxu0 0
      %527 = vmatprep.subr.bf16.mxu0 0
      %528 = vmatpush1.bf16.msra.mxu0 0
      %529 = vmatprep.subr.bf16.mxu0 0
      %530 = vmatpush1.bf16.msra.mxu0 0
      %531 = vmatprep.mubr.bf16.mxu0 0
      %532 = vmatmul.mubr.bf16.gmra.mrb[0].mxu0 %v443
      %v533 = vpop.f32.mrb[0].mxu0
      %v534 = vadd.f32 0.0, %v533
      %v535 = vpop.f32.mrb[0].mxu0
      %v536 = vadd.f32 0.0, %v535
      %v537 = vpop.f32.mrb[0].mxu0
      %v538 = vpop.f32.mrb[0].mxu0
      %539 = vdwg.mxu0
      %540 = vst [vmem:[%s376] sm:$0xff] %v493
      %541 = vst [vmem:[%s376 + $0x8] sm:$0xff] %v495
      %542 = vst [vmem:[%s376 + $0x10] sm:$0xff] %v534
      %543 = vst [vmem:[%s376 + $0x18] sm:$0xff] %v536
      %v544 = vld [vmem:[%s381] sm:$0xff]
      %v545 = vadd.f32 %v493, %v495
      %v546 = vadd.f32 %v545, %v534
      %v547 = vadd.f32 %v546, %v536
      %548 = vadd.xlane.f32.xlu0 %v547
      %v549 = vpop.xlane.xlu0 %548
      %v550 = vadd.f32 %v544, %v549
      %vm551 = vcmask 7168
      %552 = vst.msk [vmem:[%s381] sm:$0xff] %vm551, %v550
      %v553 = vld [vmem:[%s381] sm:$0xff]
      %v554 = vmul.f32 %v493, %v493
      %v555 = vmul.f32 %v495, %v495
      %v556 = vmul.f32 %v534, %v534
      %v557 = vmul.f32 %v536, %v536
      %v558 = vadd.f32 %v554, %v555
      %v559 = vadd.f32 %v558, %v556
      %v560 = vadd.f32 %v559, %v557
      %561 = vadd.xlane.f32.xlu0 %v560
      %v562 = vpop.xlane.xlu0 %561
      %v563 = vadd.f32 %v553, %v562
      %vm564 = vcmask 15368
      %565 = vst.msk [vmem:[%s381] sm:$0xff] %vm564, %v563
      %s566 = smul.u32 4, %s22
      %p567 = scmp.lt.s32.totalorder %s21, 6
      %s568 = scalar_select %p567, %s21, 6
      %p569 = scmp.lt.s32.totalorder %s566, 3
      %s570 = scalar_select %p569, %s566, 3
      %s571 = smul.addr %s568, 4
      %s572 = sadd.s32 %s570, %s571
      %s573 = smul.addr %s572, 8
      %s574 = scalar_lea.vmem %s4, %s573
      %p575 = scmp.lt.s32.totalorder %s21, 6
      %s576 = scalar_select %p575, %s21, 6
      %s577 = smul.addr %s576, 8
      %s578 = scalar_lea.vmem %s5, %s577
      // Predicated region
      $region41: #{temporal_block_forward.2} parent=35 // pred_check
        %p579 = pneg %p164
      $region42: #{temporal_block_forward.2} parent=35 // pred_check_branch
        %581 = sbr.rel (%p579) target = $region44
      $region43: #{temporal_block_forward.2} parent=35 // pred_region
        %s582 = smul.u32 4, %s22
      $region44: #{temporal_block_forward.2} parent=35 // pred_fallthru
        _
      // Predicated region
      $region45: #{temporal_block_forward.2} parent=35 // pred_check
        %p583 = pneg %p190
      $region46: #{temporal_block_forward.2} parent=35 // pred_check_branch
        %585 = sbr.rel (%p583) target = $region48
      $region47: #{temporal_block_forward.2} parent=35 // pred_region
        _
      $region48: #{temporal_block_forward.2} parent=35 // pred_fallthru
        _
    $region36: #{temporal_block_forward.2} parent=5 // pred_fallthru
      _
    %p586 = scmp.le.s32.totalorder 2, %s12
    // Predicated region
    $region49: #{temporal_block_forward.2} parent=5 // pred_check
      %p587 = pneg %p586
    $region50: #{temporal_block_forward.2} parent=5 // pred_check_branch
      %589 = sbr.rel (%p587) target = $region52
    $region51: #{temporal_block_forward.2} parent=5 // pred_region
      %s590 = ssub.s32 %s12, 2
      // Predicated region
      $region53: #{temporal_block_forward.2} parent=51 // pred_check
        %p591 = pneg %p170
      $region54: #{temporal_block_forward.2} parent=51 // pred_check_branch
        %593 = sbr.rel (%p591) target = $region56
      $region55: #{temporal_block_forward.2} parent=51 // pred_region
        %s594 = smul.u32 4, %s24
        %p595 = scmp.lt.s32.totalorder %s23, 6
        %s596 = scalar_select %p595, %s23, 6
        %p597 = scmp.lt.s32.totalorder %s594, 3
        %s598 = scalar_select %p597, %s594, 3
        %s599 = smul.addr %s596, 4
        %s600 = sadd.s32 %s598, %s599
        %s601 = smul.addr %s600, 8
        %s602 = scalar_lea.vmem %s4, %s601
      $region56: #{temporal_block_forward.2} parent=51 // pred_fallthru
        _
      // Predicated region
      $region57: #{temporal_block_forward.2} parent=51 // pred_check
        %p603 = pneg %p196
      $region58: #{temporal_block_forward.2} parent=51 // pred_check_branch
        %605 = sbr.rel (%p603) target = $region60
      $region59: #{temporal_block_forward.2} parent=51 // pred_region
        %p606 = scmp.lt.s32.totalorder %s23, 6
        %s607 = scalar_select %p606, %s23, 6
        %s608 = smul.addr %s607, 8
        %s609 = scalar_lea.vmem %s5, %s608
      $region60: #{temporal_block_forward.2} parent=51 // pred_fallthru
        _
    $region52: #{temporal_block_forward.2} parent=5 // pred_fallthru
      _
  $region6: #{temporal_block_forward.2} parent=0 // loop_footer
    %s16 = sadd.s32 1, %s12
  $region7: #{temporal_block_forward.2} parent=0 // loop_footer_branch
    %11 = sbr.rel target = $region3
  $region8: #{temporal_block_forward.2} parent=0 // loop_exit
    _

</llo_original>
